<compile_context>
chip_gen: v6e
topology: v6e:2x2x1
jax: 0.10.0
libtpu: 0.0.40
codegen_flags: <defaults>
</compile_context>

<pallas_src>
import functools

import jax
import jax.numpy as jnp
from jax.experimental import pallas as pl
from jax.experimental.pallas import tpu as pltpu


_VT_RESIDENT_BYTES = 4 * 1024 * 1024    # keep Vt resident (tn = N) below this
_VMEM_WS_BUDGET = 24 * 1024 * 1024      # double-buffered working-set target (v7x-safe)
_VMEM_LIMIT_CAP = 48 * 1024 * 1024      # stay well under v7x's 64 MiB physical VMEM


def _round_up(x: int, m: int) -> int:
    return ((x + m - 1) // m) * m


def _num_tensorcores_per_chip() -> int:
    """2 on v7x (megacore split heuristic applies only there), else 1."""
    try:
        kind = jax.devices()[0].device_kind.lower().replace(" ", "")
    except Exception:
        return 1
    return 2 if ("v7" in kind or "tpu7" in kind) else 1


def _working_set_bytes(tm: int, tn: int, r: int, out_bytes: int) -> int:
    """Double-buffered VMEM: bf16 U panel + bf16 Vt panel + f32 scale + out tile."""
    return 2 * (tm * r * 2 + r * tn * 2 + r * 4 + tm * tn * out_bytes)


def _select_tiles(M, N, R, out_bytes, tm, tn):
    auto = tm is None and tn is None
    # tn: keep Vt resident (fetched exactly once) when it is small.
    if tn is None:
        tn = N if (R * N * 2 <= _VT_RESIDENT_BYTES or N <= 512) else 512
    else:
        tn = N if tn >= N else _round_up(tn, 128)
    # tm: largest power-of-two multiple of 16 fitting the VMEM budget.
    if tm is None:
        tm = 1024
        while tm > 16 and _working_set_bytes(tm, tn, R, out_bytes) > _VMEM_WS_BUDGET:
            tm //= 2
    if tm >= M:
        tm = M                       # full dim: always a legal block shape
    else:
        tm = _round_up(tm, 16)       # bf16 U sublane tile
    # v7x (2 TensorCores): don't let the whole problem collapse to one block.
    # Split along the axis that duplicates the SMALLER operand between cores
    # (splitting N duplicates U reads, splitting M duplicates Vt reads).
    if auto and _num_tensorcores_per_chip() > 1 \
            and pl.cdiv(M, tm) * pl.cdiv(N, tn) == 1:
        u_bytes, vt_bytes = M * R * 2, R * N * 2
        if vt_bytes > u_bytes and N >= 256:
            tn = _round_up(pl.cdiv(N, 2), 128)
        elif M >= 32:
            tm = _round_up(pl.cdiv(M, 2), 16)
    return tm, tn


def _svd_adapter_kernel(u_ref, scale_ref, vt_ref, o_ref):
    """o = (U * (sigma_base*z)[None, :]) @ Vt for one (tm, tn) output tile."""
    # bf16 U panel -> f32 for the scale multiply (no bf16 VALU on v5e), back to
    # bf16 for the MXU; accumulation stays f32 via preferred_element_type.
    u_scaled = (u_ref[...].astype(jnp.float32) * scale_ref[...]).astype(jnp.bfloat16)
    o_ref[...] = jnp.dot(
        u_scaled, vt_ref[...], preferred_element_type=jnp.float32
    ).astype(o_ref.dtype)


@functools.partial(jax.jit, static_argnames=("out_dtype", "tm", "tn"))
def svd_adapter_forward(U, sigma_base, z, Vt, *, out_dtype=jnp.float32,
                        tm=None, tn=None):
    """Pallas implementation of SVDAdapter.forward().

    U: (M, R) bf16 (frozen), Vt: (R, N) bf16 (frozen),
    sigma_base: (R,) f32 (frozen), z: (R,) f32 (learned).
    Returns W_approx = (U * (sigma_base*z)[None, :]) @ Vt with shape (M, N).
    """
    M, R = U.shape
    R2, N = Vt.shape
    assert R == R2 and sigma_base.shape == (R,) and z.shape == (R,)

    # Frozen factors are stored in bf16 at init; these casts are no-ops then.
    if U.dtype != jnp.bfloat16:
        U = U.astype(jnp.bfloat16)
    if Vt.dtype != jnp.bfloat16:
        Vt = Vt.astype(jnp.bfloat16)

    # Fuse the per-singular-value scale in the wrapper: only R elements of work.
    scale = (sigma_base.astype(jnp.float32) * z.astype(jnp.float32)).reshape(1, R)

    out_dtype = jnp.dtype(out_dtype)
    tm, tn = _select_tiles(M, N, R, out_dtype.itemsize, tm, tn)

    ws = _working_set_bytes(tm, tn, R, out_dtype.itemsize)
    vmem_limit = None
    if ws > 12 * 1024 * 1024:
        # Raise the scoped-VMEM limit (v5e default 16 MiB, v6e/v7x 32 MiB)
        # while staying well under v7x's 64 MiB physical VMEM.
        vmem_limit = min(_round_up(ws * 3 // 2, 1 << 20), _VMEM_LIMIT_CAP)

    grid = (pl.cdiv(M, tm), pl.cdiv(N, tn))

    return pl.pallas_call(
        _svd_adapter_kernel,
        out_shape=jax.ShapeDtypeStruct((M, N), out_dtype),
        grid_spec=pltpu.PrefetchScalarGridSpec(
            num_scalar_prefetch=0,
            grid=grid,
            in_specs=[
                pl.BlockSpec((tm, R), lambda i, j: (i, 0)),   # U row panel (bf16)
                pl.BlockSpec((1, R), lambda i, j: (0, 0)),    # fused sigma*z (f32)
                pl.BlockSpec((R, tn), lambda i, j: (0, j)),   # Vt col panel (bf16)
            ],
            out_specs=pl.BlockSpec((tm, tn), lambda i, j: (i, j)),
        ),
        compiler_params=pltpu.CompilerParams(
            dimension_semantics=("parallel", "parallel"),
            vmem_limit_bytes=vmem_limit,
        ),
    )(U, scale, Vt)


def svd_adapter_init(key, W, rank, init_std=0.01, rank_multiple=128):
    """One-time setup (PyTorch SVDAdapter.__init__ equivalent), plain JAX.

    SVD of W, truncate to `rank`, pad the rank to a multiple of `rank_multiple`
    with zero singular values (exactly zero contribution, MXU K-dim aligned),
    and store the frozen factors in bf16.
    """
    U_, S_, Vt_ = jnp.linalg.svd(W.astype(jnp.float32), full_matrices=False)
    r = min(rank, S_.shape[0])
    U, Vt, sigma = U_[:, :r], Vt_[:r, :], S_[:r]
    z = jnp.ones((r,), jnp.float32) + init_std * jax.random.normal(
        key, (r,), dtype=jnp.float32)
    r_pad = _round_up(r, rank_multiple)
    if r_pad != r:
        pad = r_pad - r
        U = jnp.pad(U, ((0, 0), (0, pad)))
        Vt = jnp.pad(Vt, ((0, pad), (0, 0)))
        sigma = jnp.pad(sigma, (0, pad))                 # zero sigma -> no contribution
        z = jnp.pad(z, (0, pad), constant_values=1.0)
    return {
        "U": U.astype(jnp.bfloat16),               # frozen, bf16 storage
        "Vt": Vt.astype(jnp.bfloat16),             # frozen, bf16 storage
        "sigma_base": sigma.astype(jnp.float32),   # frozen
        "z": z.astype(jnp.float32),                # learned
    }


if __name__ == "__main__":
    key = jax.random.PRNGKey(0)
    k_w, k_z = jax.random.split(key)

    # Small, deliberately non-tile-aligned shapes to exercise the ragged
    # boundary handling and the rank padding (96 -> 128).
    M, N = 200, 336
    rank = 96
    init_std = 0.01

    W = jax.random.normal(k_w, (M, N), dtype=jnp.float32)
    params = svd_adapter_init(k_z, W, rank, init_std=init_std)
    U, Vt = params["U"], params["Vt"]
    sigma_base, z = params["sigma_base"], params["z"]

    # --- Pallas forward (auto tiling). ---
    W_approx = jax.block_until_ready(svd_adapter_forward(U, sigma_base, z, Vt))
    assert W_approx.shape == (M, N) and W_approx.dtype == jnp.float32

    # --- Matched-precision reference (same bf16 operand rounding, f32 acc). ---
    scaled = sigma_base * z
    u_f32 = U.astype(jnp.float32)
    vt_f32 = Vt.astype(jnp.float32)
    u_scaled_bf = (u_f32 * scaled[None, :]).astype(jnp.bfloat16).astype(jnp.float32)
    W_ref_matched = jnp.dot(u_scaled_bf, vt_f32, precision=jax.lax.Precision.HIGHEST)
    err = float(jnp.max(jnp.abs(W_approx - W_ref_matched)))
    assert err < 2e-3, f"matched-precision error too large: {err}"

    # --- Full-f32 reference (pre-bf16 factors): only bf16 operand rounding. ---
    U32, S32, Vt32 = jnp.linalg.svd(W, full_matrices=False)
    r = min(rank, S32.shape[0])
    W_ref_f32 = (U32[:, :r] * (S32[:r] * z[:r])[None, :]) @ Vt32[:r, :]
    err32 = float(jnp.max(jnp.abs(W_approx - W_ref_f32)))
    assert err32 < 6e-2, f"f32-reference error too large: {err32}"

    # --- Forced small tiles: exercises ragged boundary blocks on both axes. ---
    W_small_tiles = jax.block_until_ready(
        svd_adapter_forward(U, sigma_base, z, Vt, tm=64, tn=128))
    err_t = float(jnp.max(jnp.abs(W_small_tiles - W_ref_matched)))
    assert err_t < 2e-3, f"ragged-tile error too large: {err_t}"

    # --- bf16 output path (halves the dominant HBM writeback). ---
    W_bf16 = jax.block_until_ready(
        svd_adapter_forward(U, sigma_base, z, Vt, out_dtype=jnp.bfloat16))
    assert W_bf16.dtype == jnp.bfloat16
    err_b = float(jnp.max(jnp.abs(W_bf16.astype(jnp.float32) - W_ref_matched)))
    assert err_b < 5e-2, f"bf16-output error too large: {err_b}"

    print("KERNEL_OK")
</pallas_src>

<mosaic_0001>
module attributes {stable_mosaic.version = 11 : i64} {
  func.func @_svd_adapter_kernel(%arg0: i32, %arg1: i32, %arg2: memref<200x128xbf16, #tpu.memory_space<vmem>>, %arg3: memref<1x128xf32, #tpu.memory_space<vmem>>, %arg4: memref<128x336xbf16, #tpu.memory_space<vmem>>, %arg5: memref<200x336xf32, #tpu.memory_space<vmem>>) attributes {dimension_semantics = [#tpu.dimension_semantics<parallel>, #tpu.dimension_semantics<parallel>], iteration_bounds = array<i64: 1, 1>, scalar_prefetch = 0 : i64, scratch_operands = 0 : i64, tpu.core_type = #tpu.core_type<tc>, window_params = [{transform_indices = @transform_0, window_bounds = array<i64: 200, 128>}, {pipeline_mode = #tpu.pipeline_mode<synchronous>, transform_indices = @transform_1, window_bounds = array<i64: 1, 128>}, {transform_indices = @transform_2, window_bounds = array<i64: 128, 336>}, {transform_indices = @transform_3, window_bounds = array<i64: 200, 336>}]} {
    %c0 = arith.constant 0 : index
    %c0_0 = arith.constant 0 : index
    %0 = vector.load %arg2[%c0, %c0_0] : memref<200x128xbf16, #tpu.memory_space<vmem>>, vector<200x128xbf16>
    %1 = arith.extf %0 : vector<200x128xbf16> to vector<200x128xf32>
    %c0_1 = arith.constant 0 : index
    %c0_2 = arith.constant 0 : index
    %2 = vector.load %arg3[%c0_1, %c0_2] : memref<1x128xf32, #tpu.memory_space<vmem>>, vector<1x128xf32>
    %3 = vector.broadcast %2 : vector<1x128xf32> to vector<200x128xf32>
    %4 = arith.mulf %1, %3 : vector<200x128xf32>
    %5 = arith.truncf %4 : vector<200x128xf32> to vector<200x128xbf16>
    %c0_3 = arith.constant 0 : index
    %c0_4 = arith.constant 0 : index
    %6 = vector.load %arg4[%c0_3, %c0_4] : memref<128x336xbf16, #tpu.memory_space<vmem>>, vector<128x336xbf16>
    %cst = arith.constant dense<0.000000e+00> : vector<200x336xf32>
    %7 = tpu.matmul %5, %6, %cst {dimension_numbers = #tpu.dot_dimension_numbers<[1], [0], [0], [1], [0, 0, 1, 1], [], []>} : vector<200x128xbf16>, vector<128x336xbf16>, vector<200x336xf32> -> vector<200x336xf32>
    %c0_5 = arith.constant 0 : index
    %c0_6 = arith.constant 0 : index
    %8 = vector.load %arg5[%c0_5, %c0_6] : memref<200x336xf32, #tpu.memory_space<vmem>>, vector<200x336xf32>
    tpu.vector_store %arg5[%c0_5, %c0_6], %7 {strides = array<i32>} : memref<200x336xf32, #tpu.memory_space<vmem>>, vector<200x336xf32>,
    return
  }
  func.func @transform_0(%arg0: i32, %arg1: i32) -> (i32, i32) {
    %c0_i32 = arith.constant 0 : i32
    %c0_i32_0 = arith.constant 0 : i32
    return %arg0, %c0_i32 : i32, i32
  }
  func.func @transform_1(%arg0: i32, %arg1: i32) -> (i32, i32) {
    %c0_i32 = arith.constant 0 : i32
    %c0_i32_0 = arith.constant 0 : i32
    %c0_i32_1 = arith.constant 0 : i32
    return %c0_i32, %c0_i32_0 : i32, i32
  }
  func.func @transform_2(%arg0: i32, %arg1: i32) -> (i32, i32) {
    %c0_i32 = arith.constant 0 : i32
    %c0_i32_0 = arith.constant 0 : i32
    return %c0_i32, %arg1 : i32, i32
  }
  func.func @transform_3(%arg0: i32, %arg1: i32) -> (i32, i32) {
    %c0_i32 = arith.constant 0 : i32
    return %arg0, %arg1 : i32, i32
  }
}

</mosaic_0001>

<llo_original>
// kernel: svd_adapter_forward.1
$region0: #{svd_adapter_forward.1}
  #allocation0 [shape = 'u32[]', space=smem, size = 0x4, offset = 0x4, fixed_abs, tag = 'smem constant byte address 0x4 - core index']
  #allocation1 [shape = 'u32[144,128]{1,0:T(1,128)}', space=vmem, size = 0x12000, scoped, tag = 'internal scratch']
  %s0 = inlined_call_operand.vmem [shape: bf16[200,128], index: 0, kind: input, shape index: {}]
  %s1 = inlined_call_operand.vmem [shape: f32[1,128], index: 1, kind: input, shape index: {}]
  %s2 = inlined_call_operand.vmem [shape: bf16[128,336], index: 2, kind: input, shape index: {}]
  %s3 = inlined_call_operand.hbm [shape: f32[200,336], index: 3, kind: output, shape index: {}]
  %s4 = sld [smem:[#allocation0]]
  $region22: #{svd_adapter_forward.1} parent=0
    _
  %s6 = ssub.s32 1, %s4
  %s7 = scalar_select 0, %s6, %s4
  $region1: #{svd_adapter_forward.1} parent=0
    #allocation2 [shape = 'u8[307200]{0}', space=vmem, size = 0x4b000, scoped, tag = 'output window, operand 0, single buffered']
    #allocation3 [shape = 's32[1]{0}', space=sflag, size = 0x4, scoped, tag = 'scoped memory for svd_adapter_forward.1']
    %8 = vsyncpa [#allocation3], 0
    // Predicated region
    $region2: #{svd_adapter_forward.1} parent=1 // pred_check
      _
    $region3: #{svd_adapter_forward.1} parent=1 // pred_check_branch
      %10 = sbr.rel (0) target = $region5
    $region4: #{svd_adapter_forward.1} parent=1 // pred_region
      _
    $region5: #{svd_adapter_forward.1} parent=1 // pred_fallthru
      _
    // Predicated region
    $region6: #{svd_adapter_forward.1} parent=1 // pred_check
      _
    $region7: #{svd_adapter_forward.1} parent=1 // pred_check_branch
      %12 = sbr.rel (0) target = $region9
    $region8: #{svd_adapter_forward.1} parent=1 // pred_region
      _
    $region9: #{svd_adapter_forward.1} parent=1 // pred_fallthru
      _
    // Predicated region
    $region10: #{svd_adapter_forward.1} parent=1 // pred_check
      _
    $region11: #{svd_adapter_forward.1} parent=1 // pred_check_branch
      %14 = sbr.rel (0) target = $region13
    $region12: #{svd_adapter_forward.1} parent=1 // pred_region
      _
    $region13: #{svd_adapter_forward.1} parent=1 // pred_fallthru
      _
    %v16 = vld [vmem:[%s0] sm:$0xf]
    %v17 = vld [vmem:[%s0 + $0x4] sm:$0xf]
    %v18 = vld [vmem:[%s0 + $0x8] sm:$0xf]
    %v19 = vld [vmem:[%s0 + $0xc] sm:$0xf]
    %v20 = vld [vmem:[%s0 + $0x10] sm:$0xf]
    %v21 = vld [vmem:[%s0 + $0x14] sm:$0xf]
    %v22 = vld [vmem:[%s0 + $0x18] sm:$0xf]
    %v23 = vld [vmem:[%s0 + $0x1c] sm:$0xf]
    %v24 = vld [vmem:[%s0 + $0x20] sm:$0xf]
    %v25 = vld [vmem:[%s0 + $0x24] sm:$0xf]
    %v26 = vld [vmem:[%s0 + $0x28] sm:$0xf]
    %v27 = vld [vmem:[%s0 + $0x2c] sm:$0xf]
    %v28 = vld [vmem:[%s0 + $0x30] sm:$0xf]
    %v29 = vld [vmem:[%s0 + $0x34] sm:$0xf]
    %v30 = vld [vmem:[%s0 + $0x38] sm:$0xf]
    %v31 = vld [vmem:[%s0 + $0x3c] sm:$0xf]
    %v32 = vld [vmem:[%s0 + $0x40] sm:$0xf]
    %v33 = vld [vmem:[%s0 + $0x44] sm:$0xf]
    %v34 = vld [vmem:[%s0 + $0x48] sm:$0xf]
    %v35 = vld [vmem:[%s0 + $0x4c] sm:$0xf]
    %v36 = vld [vmem:[%s0 + $0x50] sm:$0xf]
    %v37 = vld [vmem:[%s0 + $0x54] sm:$0xf]
    %v38 = vld [vmem:[%s0 + $0x58] sm:$0xf]
    %v39 = vld [vmem:[%s0 + $0x5c] sm:$0xf]
    %v40 = vld [vmem:[%s0 + $0x60] sm:$0xf]
    %v41 = vunpack.c.l.bf16 %v16
    %v42 = vunpack.c.l.bf16 %v17
    %v43 = vunpack.c.l.bf16 %v18
    %v44 = vunpack.c.l.bf16 %v19
    %v45 = vunpack.c.l.bf16 %v20
    %v46 = vunpack.c.l.bf16 %v21
    %v47 = vunpack.c.l.bf16 %v22
    %v48 = vunpack.c.l.bf16 %v23
    %v49 = vunpack.c.l.bf16 %v24
    %v50 = vunpack.c.l.bf16 %v25
    %v51 = vunpack.c.l.bf16 %v26
    %v52 = vunpack.c.l.bf16 %v27
    %v53 = vunpack.c.l.bf16 %v28
    %v54 = vunpack.c.l.bf16 %v29
    %v55 = vunpack.c.l.bf16 %v30
    %v56 = vunpack.c.l.bf16 %v31
    %v57 = vunpack.c.l.bf16 %v32
    %v58 = vunpack.c.l.bf16 %v33
    %v59 = vunpack.c.l.bf16 %v34
    %v60 = vunpack.c.l.bf16 %v35
    %v61 = vunpack.c.l.bf16 %v36
    %v62 = vunpack.c.l.bf16 %v37
    %v63 = vunpack.c.l.bf16 %v38
    %v64 = vunpack.c.l.bf16 %v39
    %v65 = vunpack.c.l.bf16 %v40
    %v66 = vld [vmem:[%s1] sm:$0x1]
    %v68 = vlaneseq
    %v69 = vshrl.u32 %v68, 7
    %v70 = vsub.s32 0, %v69
    %v71 = vrot.slane %v66, %v70
    %v73 = vmul.f32 %v41, %v71
    %v74 = vmul.f32 %v42, %v71
    %v75 = vmul.f32 %v43, %v71
    %v76 = vmul.f32 %v44, %v71
    %v77 = vmul.f32 %v45, %v71
    %v78 = vmul.f32 %v46, %v71
    %v79 = vmul.f32 %v47, %v71
    %v80 = vmul.f32 %v48, %v71
    %v81 = vmul.f32 %v49, %v71
    %v82 = vmul.f32 %v50, %v71
    %v83 = vmul.f32 %v51, %v71
    %v84 = vmul.f32 %v52, %v71
    %v85 = vmul.f32 %v53, %v71
    %v86 = vmul.f32 %v54, %v71
    %v87 = vmul.f32 %v55, %v71
    %v88 = vmul.f32 %v56, %v71
    %v89 = vmul.f32 %v57, %v71
    %v90 = vmul.f32 %v58, %v71
    %v91 = vmul.f32 %v59, %v71
    %v92 = vmul.f32 %v60, %v71
    %v93 = vmul.f32 %v61, %v71
    %v94 = vmul.f32 %v62, %v71
    %v95 = vmul.f32 %v63, %v71
    %v96 = vmul.f32 %v64, %v71
    %v97 = vmul.f32 %v65, %v71
    %v98 = vpack.c.bf16 %v74, %v73
    %v99 = vpack.c.bf16 %v76, %v75
    %v100 = vpack.c.bf16 %v78, %v77
    %v101 = vpack.c.bf16 %v80, %v79
    %v102 = vpack.c.bf16 %v82, %v81
    %v103 = vpack.c.bf16 %v84, %v83
    %v104 = vpack.c.bf16 %v86, %v85
    %v105 = vpack.c.bf16 %v88, %v87
    %v106 = vpack.c.bf16 %v90, %v89
    %v107 = vpack.c.bf16 %v92, %v91
    %v108 = vpack.c.bf16 %v94, %v93
    %v109 = vpack.c.bf16 %v96, %v95
    %v110 = vpack.c.bf16 %v97, %v97
    %v111 = vld [vmem:[%s2] sm:$0xff]
    %v112 = vld [vmem:[%s2 + $0x8] sm:$0xf]
    %v113 = vld [vmem:[%s2 + $0xc] sm:$0xff]
    %v114 = vld [vmem:[%s2 + $0x14] sm:$0xf]
    %v115 = vld [vmem:[%s2 + $0x18] sm:$0xff]
    %v116 = vld [vmem:[%s2 + $0x20] sm:$0xf]
    %v117 = vld [vmem:[%s2 + $0x24] sm:$0xff]
    %v118 = vld [vmem:[%s2 + $0x2c] sm:$0xf]
    %v119 = vld [vmem:[%s2 + $0x30] sm:$0xff]
    %v120 = vld [vmem:[%s2 + $0x38] sm:$0xf]
    %v121 = vld [vmem:[%s2 + $0x3c] sm:$0xff]
    %v122 = vld [vmem:[%s2 + $0x44] sm:$0xf]
    %v123 = vld [vmem:[%s2 + $0x48] sm:$0xff]
    %v124 = vld [vmem:[%s2 + $0x50] sm:$0xf]
    %v125 = vld [vmem:[%s2 + $0x54] sm:$0xff]
    %v126 = vld [vmem:[%s2 + $0x5c] sm:$0xf]
    %v127 = vld [vmem:[%s2 + $0x60] sm:$0xff]
    %v128 = vld [vmem:[%s2 + $0x68] sm:$0xf]
    %v129 = vld [vmem:[%s2 + $0x6c] sm:$0xff]
    %v130 = vld [vmem:[%s2 + $0x74] sm:$0xf]
    %v131 = vld [vmem:[%s2 + $0x78] sm:$0xff]
    %v132 = vld [vmem:[%s2 + $0x80] sm:$0xf]
    %v133 = vld [vmem:[%s2 + $0x84] sm:$0xff]
    %v134 = vld [vmem:[%s2 + $0x8c] sm:$0xf]
    %v135 = vld [vmem:[%s2 + $0x90] sm:$0xff]
    %v136 = vld [vmem:[%s2 + $0x98] sm:$0xf]
    %v137 = vld [vmem:[%s2 + $0x9c] sm:$0xff]
    %v138 = vld [vmem:[%s2 + $0xa4] sm:$0xf]
    %v139 = vld [vmem:[%s2 + $0xa8] sm:$0xff]
    %v140 = vld [vmem:[%s2 + $0xb0] sm:$0xf]
    %v141 = vld [vmem:[%s2 + $0xb4] sm:$0xff]
    %v142 = vld [vmem:[%s2 + $0xbc] sm:$0xf]
    %v175 = vunpack.c.l.b16 %v111
    %v176 = vunpack.c.h.b16 %v111
    %v177 = vunpack.c.l.b16 %v112
    %v178 = vunpack.c.l.b16 %v113
    %v179 = vunpack.c.h.b16 %v113
    %v180 = vunpack.c.l.b16 %v114
    %v181 = vunpack.c.l.b16 %v115
    %v182 = vunpack.c.h.b16 %v115
    %v183 = vunpack.c.l.b16 %v116
    %v184 = vunpack.c.l.b16 %v117
    %v185 = vunpack.c.h.b16 %v117
    %v186 = vunpack.c.l.b16 %v118
    %v187 = vunpack.c.l.b16 %v119
    %v188 = vunpack.c.h.b16 %v119
    %v189 = vunpack.c.l.b16 %v120
    %v190 = vunpack.c.l.b16 %v121
    %v191 = vunpack.c.h.b16 %v121
    %v192 = vunpack.c.l.b16 %v122
    %v193 = vunpack.c.l.b16 %v123
    %v194 = vunpack.c.h.b16 %v123
    %v195 = vunpack.c.l.b16 %v124
    %v196 = vunpack.c.l.b16 %v125
    %v197 = vunpack.c.h.b16 %v125
    %v198 = vunpack.c.l.b16 %v126
    %v199 = vunpack.c.l.b16 %v127
    %v200 = vunpack.c.h.b16 %v127
    %v201 = vunpack.c.l.b16 %v128
    %v202 = vunpack.c.l.b16 %v129
    %v203 = vunpack.c.h.b16 %v129
    %v204 = vunpack.c.l.b16 %v130
    %v205 = vunpack.c.l.b16 %v131
    %v206 = vunpack.c.h.b16 %v131
    %v207 = vunpack.c.l.b16 %v132
    %v208 = vunpack.c.l.b16 %v133
    %v209 = vunpack.c.h.b16 %v133
    %v210 = vunpack.c.l.b16 %v134
    %v211 = vunpack.c.l.b16 %v135
    %v212 = vunpack.c.h.b16 %v135
    %v213 = vunpack.c.l.b16 %v136
    %v214 = vunpack.c.l.b16 %v137
    %v215 = vunpack.c.h.b16 %v137
    %v216 = vunpack.c.l.b16 %v138
    %v217 = vunpack.c.l.b16 %v139
    %v218 = vunpack.c.h.b16 %v139
    %v219 = vunpack.c.l.b16 %v140
    %v220 = vunpack.c.l.b16 %v141
    %v221 = vunpack.c.h.b16 %v141
    %v222 = vunpack.c.l.b16 %v142
    %v223 = vpack.c.b16 %v178, %v175
    %v224 = vpack.c.b16 %v179, %v176
    %v225 = vpack.c.b16 %v180, %v177
    %v226 = vpack.c.b16 %v184, %v181
    %v227 = vpack.c.b16 %v185, %v182
    %v228 = vpack.c.b16 %v186, %v183
    %v229 = vpack.c.b16 %v190, %v187
    %v230 = vpack.c.b16 %v191, %v188
    %v231 = vpack.c.b16 %v192, %v189
    %v232 = vpack.c.b16 %v196, %v193
    %v233 = vpack.c.b16 %v197, %v194
    %v234 = vpack.c.b16 %v198, %v195
    %v235 = vpack.c.b16 %v202, %v199
    %v236 = vpack.c.b16 %v203, %v200
    %v237 = vpack.c.b16 %v204, %v201
    %v238 = vpack.c.b16 %v208, %v205
    %v239 = vpack.c.b16 %v209, %v206
    %v240 = vpack.c.b16 %v210, %v207
    %v241 = vpack.c.b16 %v214, %v211
    %v242 = vpack.c.b16 %v215, %v212
    %v243 = vpack.c.b16 %v216, %v213
    %v244 = vpack.c.b16 %v220, %v217
    %v245 = vpack.c.b16 %v221, %v218
    %v246 = vpack.c.b16 %v222, %v219
    %271 = vmatprep.subr.bf16.mxu0 %v245
    %272 = vmatpush1.bf16.msra.mxu0 %v244
    %273 = vmatprep.subr.bf16.mxu0 %v242
    %274 = vmatpush1.bf16.msra.mxu0 %v241
    %275 = vmatprep.subr.bf16.mxu0 %v239
    %276 = vmatpush1.bf16.msra.mxu0 %v238
    %277 = vmatprep.subr.bf16.mxu0 %v236
    %278 = vmatpush1.bf16.msra.mxu0 %v235
    %279 = vmatprep.subr.bf16.mxu0 %v233
    %280 = vmatpush1.bf16.msra.mxu0 %v232
    %281 = vmatprep.subr.bf16.mxu0 %v230
    %282 = vmatpush1.bf16.msra.mxu0 %v229
    %283 = vmatprep.subr.bf16.mxu0 %v227
    %284 = vmatpush1.bf16.msra.mxu0 %v226
    %285 = vmatprep.subr.bf16.mxu0 %v224
    %286 = vmatpush1.bf16.msra.mxu0 %v223
    %287 = vmatprep.subr.bf16.mxu0 0
    %288 = vmatpush2.bf16.msra.mxu0 0
    %289 = vmatprep.subr.bf16.mxu0 0
    %290 = vmatpush2.bf16.msra.mxu0 0
    %291 = vmatprep.subr.bf16.mxu0 0
    %292 = vmatpush2.bf16.msra.mxu0 0
    %293 = vmatprep.subr.bf16.mxu0 0
    %294 = vmatpush2.bf16.msra.mxu0 0
    %295 = vmatprep.subr.bf16.mxu0 0
    %296 = vmatpush2.bf16.msra.mxu0 0
    %297 = vmatprep.subr.bf16.mxu0 0
    %298 = vmatpush2.bf16.msra.mxu0 0
    %299 = vmatprep.subr.bf16.mxu0 0
    %300 = vmatpush2.bf16.msra.mxu0 0
    %301 = vmatprep.subr.bf16.mxu0 0
    %302 = vmatpush2.bf16.msra.mxu0 0
    %303 = vmatprep.mubr.bf16.mxu0 0
    %304 = vmatmul.mubr.bf16.gmra.mxu0 %v98
    %v305 = vpop.f32.mrf.mxu0
    %v306 = vadd.f32 0.0, %v305
    %v307 = vpop.f32.mrf.mxu0
    %v308 = vadd.f32 0.0, %v307
    %v309 = vpop.f32.mrf.mxu0
    %v310 = vadd.f32 0.0, %v309
    %v311 = vpop.f32.mrf.mxu0
    %v312 = vadd.f32 0.0, %v311
    %313 = vmatprep.mubr.bf16.mxu0 0
    %314 = vmatmul.mubr.bf16.gmra.mxu0 %v99
    %v315 = vpop.f32.mrf.mxu0
    %v316 = vadd.f32 0.0, %v315
    %v317 = vpop.f32.mrf.mxu0
    %v318 = vadd.f32 0.0, %v317
    %v319 = vpop.f32.mrf.mxu0
    %v320 = vadd.f32 0.0, %v319
    %v321 = vpop.f32.mrf.mxu0
    %v322 = vadd.f32 0.0, %v321
    %323 = vmatprep.mubr.bf16.mxu0 0
    %324 = vmatmul.mubr.bf16.gmra.mxu0 %v100
    %v325 = vpop.f32.mrf.mxu0
    %v326 = vadd.f32 0.0, %v325
    %v327 = vpop.f32.mrf.mxu0
    %v328 = vadd.f32 0.0, %v327
    %v329 = vpop.f32.mrf.mxu0
    %v330 = vadd.f32 0.0, %v329
    %v331 = vpop.f32.mrf.mxu0
    %v332 = vadd.f32 0.0, %v331
    %333 = vmatprep.mubr.bf16.mxu0 0
    %334 = vmatmul.mubr.bf16.gmra.mxu0 %v101
    %v335 = vpop.f32.mrf.mxu0
    %v336 = vadd.f32 0.0, %v335
    %v337 = vpop.f32.mrf.mxu0
    %v338 = vadd.f32 0.0, %v337
    %v339 = vpop.f32.mrf.mxu0
    %v340 = vadd.f32 0.0, %v339
    %v341 = vpop.f32.mrf.mxu0
    %v342 = vadd.f32 0.0, %v341
    %343 = vmatprep.mubr.bf16.mxu0 0
    %344 = vmatmul.mubr.bf16.gmra.mxu0 %v102
    %v345 = vpop.f32.mrf.mxu0
    %v346 = vadd.f32 0.0, %v345
    %v347 = vpop.f32.mrf.mxu0
    %v348 = vadd.f32 0.0, %v347
    %v349 = vpop.f32.mrf.mxu0
    %v350 = vadd.f32 0.0, %v349
    %v351 = vpop.f32.mrf.mxu0
    %v352 = vadd.f32 0.0, %v351
    %353 = vmatprep.mubr.bf16.mxu0 0
    %354 = vmatmul.mubr.bf16.gmra.mxu0 %v103
    %v355 = vpop.f32.mrf.mxu0
    %v356 = vadd.f32 0.0, %v355
    %v357 = vpop.f32.mrf.mxu0
    %v358 = vadd.f32 0.0, %v357
    %v359 = vpop.f32.mrf.mxu0
    %v360 = vadd.f32 0.0, %v359
    %v361 = vpop.f32.mrf.mxu0
    %v362 = vadd.f32 0.0, %v361
    %363 = vmatprep.mubr.bf16.mxu0 0
    %364 = vmatmul.mubr.bf16.gmra.mxu0 %v104
    %v365 = vpop.f32.mrf.mxu0
    %v366 = vadd.f32 0.0, %v365
    %v367 = vpop.f32.mrf.mxu0
    %v368 = vadd.f32 0.0, %v367
    %v369 = vpop.f32.mrf.mxu0
    %v370 = vadd.f32 0.0, %v369
    %v371 = vpop.f32.mrf.mxu0
    %v372 = vadd.f32 0.0, %v371
    %373 = vmatprep.mubr.bf16.mxu0 0
    %374 = vmatmul.mubr.bf16.gmra.mxu0 %v105
    %v375 = vpop.f32.mrf.mxu0
    %v376 = vadd.f32 0.0, %v375
    %v377 = vpop.f32.mrf.mxu0
    %v378 = vadd.f32 0.0, %v377
    %v379 = vpop.f32.mrf.mxu0
    %v380 = vadd.f32 0.0, %v379
    %v381 = vpop.f32.mrf.mxu0
    %v382 = vadd.f32 0.0, %v381
    %383 = vmatprep.mubr.bf16.mxu0 0
    %384 = vmatmul.mubr.bf16.gmra.mxu0 %v106
    %v385 = vpop.f32.mrf.mxu0
    %v386 = vadd.f32 0.0, %v385
    %v387 = vpop.f32.mrf.mxu0
    %v388 = vadd.f32 0.0, %v387
    %v389 = vpop.f32.mrf.mxu0
    %v390 = vadd.f32 0.0, %v389
    %v391 = vpop.f32.mrf.mxu0
    %v392 = vadd.f32 0.0, %v391
    %393 = vmatprep.mubr.bf16.mxu0 0
    %394 = vmatmul.mubr.bf16.gmra.mxu0 %v107
    %v395 = vpop.f32.mrf.mxu0
    %v396 = vadd.f32 0.0, %v395
    %v397 = vpop.f32.mrf.mxu0
    %v398 = vadd.f32 0.0, %v397
    %v399 = vpop.f32.mrf.mxu0
    %v400 = vadd.f32 0.0, %v399
    %v401 = vpop.f32.mrf.mxu0
    %v402 = vadd.f32 0.0, %v401
    %403 = vmatprep.mubr.bf16.mxu0 0
    %404 = vmatmul.mubr.bf16.gmra.mxu0 %v108
    %v405 = vpop.f32.mrf.mxu0
    %v406 = vadd.f32 0.0, %v405
    %v407 = vpop.f32.mrf.mxu0
    %v408 = vadd.f32 0.0, %v407
    %v409 = vpop.f32.mrf.mxu0
    %v410 = vadd.f32 0.0, %v409
    %v411 = vpop.f32.mrf.mxu0
    %v412 = vadd.f32 0.0, %v411
    %413 = vmatprep.mubr.bf16.mxu0 0
    %414 = vmatmul.mubr.bf16.gmra.mxu0 %v109
    %v415 = vpop.f32.mrf.mxu0
    %v416 = vadd.f32 0.0, %v415
    %v417 = vpop.f32.mrf.mxu0
    %v418 = vadd.f32 0.0, %v417
    %v419 = vpop.f32.mrf.mxu0
    %v420 = vadd.f32 0.0, %v419
    %v421 = vpop.f32.mrf.mxu0
    %v422 = vadd.f32 0.0, %v421
    %423 = vmatprep.mubr.bf16.mxu0 0
    %424 = vmatmul.mubr.bf16.gmra.mxu0 %v110
    %v425 = vpop.f32.mrf.mxu0
    %v426 = vadd.f32 0.0, %v425
    %v427 = vpop.f32.mrf.mxu0
    %v428 = vadd.f32 0.0, %v427
    %v429 = vpop.f32.mrf.mxu0
    %v430 = vpop.f32.mrf.mxu0
    %431 = vdwg.mxu0
    %432 = vmatprep.subr.bf16.mxu0 0
    %433 = vmatpush1.bf16.msra.mxu0 %v246
    %434 = vmatprep.subr.bf16.mxu0 0
    %435 = vmatpush1.bf16.msra.mxu0 %v243
    %436 = vmatprep.subr.bf16.mxu0 0
    %437 = vmatpush1.bf16.msra.mxu0 %v240
    %438 = vmatprep.subr.bf16.mxu0 0
    %439 = vmatpush1.bf16.msra.mxu0 %v237
    %440 = vmatprep.subr.bf16.mxu0 0
    %441 = vmatpush1.bf16.msra.mxu0 %v234
    %442 = vmatprep.subr.bf16.mxu0 0
    %443 = vmatpush1.bf16.msra.mxu0 %v231
    %444 = vmatprep.subr.bf16.mxu0 0
    %445 = vmatpush1.bf16.msra.mxu0 %v228
    %446 = vmatprep.subr.bf16.mxu0 0
    %447 = vmatpush1.bf16.msra.mxu0 %v225
    %448 = vmatprep.subr.bf16.mxu0 0
    %449 = vmatpush2.bf16.msra.mxu0 0
    %450 = vmatprep.subr.bf16.mxu0 0
    %451 = vmatpush2.bf16.msra.mxu0 0
    %452 = vmatprep.subr.bf16.mxu0 0
    %453 = vmatpush2.bf16.msra.mxu0 0
    %454 = vmatprep.subr.bf16.mxu0 0
    %455 = vmatpush2.bf16.msra.mxu0 0
    %456 = vmatprep.subr.bf16.mxu0 0
    %457 = vmatpush2.bf16.msra.mxu0 0
    %458 = vmatprep.subr.bf16.mxu0 0
    %459 = vmatpush2.bf16.msra.mxu0 0
    %460 = vmatprep.subr.bf16.mxu0 0
    %461 = vmatpush2.bf16.msra.mxu0 0
    %462 = vmatprep.subr.bf16.mxu0 0
    %463 = vmatpush2.bf16.msra.mxu0 0
    %464 = vmatprep.mubr.bf16.mxu0 0
    %465 = vmatmul.mubr.bf16.gmra.mxu0 %v98
    %v466 = vpop.f32.mrf.mxu0
    %v467 = vadd.f32 0.0, %v466
    %v468 = vpop.f32.mrf.mxu0
    %v469 = vpop.f32.mrf.mxu0
    %v470 = vadd.f32 0.0, %v469
    %v471 = vpop.f32.mrf.mxu0
    %472 = vmatprep.mubr.bf16.mxu0 0
    %473 = vmatmul.mubr.bf16.gmra.mxu0 %v99
    %v474 = vpop.f32.mrf.mxu0
    %v475 = vadd.f32 0.0, %v474
    %v476 = vpop.f32.mrf.mxu0
    %v477 = vpop.f32.mrf.mxu0
    %v478 = vadd.f32 0.0, %v477
    %v479 = vpop.f32.mrf.mxu0
    %480 = vmatprep.mubr.bf16.mxu0 0
    %481 = vmatmul.mubr.bf16.gmra.mxu0 %v100
    %v482 = vpop.f32.mrf.mxu0
    %v483 = vadd.f32 0.0, %v482
    %v484 = vpop.f32.mrf.mxu0
    %v485 = vpop.f32.mrf.mxu0
    %v486 = vadd.f32 0.0, %v485
    %v487 = vpop.f32.mrf.mxu0
    %488 = vmatprep.mubr.bf16.mxu0 0
    %489 = vmatmul.mubr.bf16.gmra.mxu0 %v101
    %v490 = vpop.f32.mrf.mxu0
    %v491 = vadd.f32 0.0, %v490
    %v492 = vpop.f32.mrf.mxu0
    %v493 = vpop.f32.mrf.mxu0
    %v494 = vadd.f32 0.0, %v493
    %v495 = vpop.f32.mrf.mxu0
    %496 = vmatprep.mubr.bf16.mxu0 0
    %497 = vmatmul.mubr.bf16.gmra.mxu0 %v102
    %v498 = vpop.f32.mrf.mxu0
    %v499 = vadd.f32 0.0, %v498
    %v500 = vpop.f32.mrf.mxu0
    %v501 = vpop.f32.mrf.mxu0
    %v502 = vadd.f32 0.0, %v501
    %v503 = vpop.f32.mrf.mxu0
    %504 = vmatprep.mubr.bf16.mxu0 0
    %505 = vmatmul.mubr.bf16.gmra.mxu0 %v103
    %v506 = vpop.f32.mrf.mxu0
    %v507 = vadd.f32 0.0, %v506
    %v508 = vpop.f32.mrf.mxu0
    %v509 = vpop.f32.mrf.mxu0
    %v510 = vadd.f32 0.0, %v509
    %v511 = vpop.f32.mrf.mxu0
    %512 = vmatprep.mubr.bf16.mxu0 0
    %513 = vmatmul.mubr.bf16.gmra.mxu0 %v104
    %v514 = vpop.f32.mrf.mxu0
    %v515 = vadd.f32 0.0, %v514
    %v516 = vpop.f32.mrf.mxu0
    %v517 = vpop.f32.mrf.mxu0
    %v518 = vadd.f32 0.0, %v517
    %v519 = vpop.f32.mrf.mxu0
    %520 = vmatprep.mubr.bf16.mxu0 0
    %521 = vmatmul.mubr.bf16.gmra.mxu0 %v105
    %v522 = vpop.f32.mrf.mxu0
    %v523 = vadd.f32 0.0, %v522
    %v524 = vpop.f32.mrf.mxu0
    %v525 = vpop.f32.mrf.mxu0
    %v526 = vadd.f32 0.0, %v525
    %v527 = vpop.f32.mrf.mxu0
    %528 = vmatprep.mubr.bf16.mxu0 0
    %529 = vmatmul.mubr.bf16.gmra.mxu0 %v106
    %v530 = vpop.f32.mrf.mxu0
    %v531 = vadd.f32 0.0, %v530
    %v532 = vpop.f32.mrf.mxu0
    %v533 = vpop.f32.mrf.mxu0
    %v534 = vadd.f32 0.0, %v533
    %v535 = vpop.f32.mrf.mxu0
    %536 = vmatprep.mubr.bf16.mxu0 0
    %537 = vmatmul.mubr.bf16.gmra.mxu0 %v107
    %v538 = vpop.f32.mrf.mxu0
    %v539 = vadd.f32 0.0, %v538
    %v540 = vpop.f32.mrf.mxu0
    %v541 = vpop.f32.mrf.mxu0
    %v542 = vadd.f32 0.0, %v541
    %v543 = vpop.f32.mrf.mxu0
    %544 = vmatprep.mubr.bf16.mxu0 0
    %545 = vmatmul.mubr.bf16.gmra.mxu0 %v108
    %v546 = vpop.f32.mrf.mxu0
    %v547 = vadd.f32 0.0, %v546
    %v548 = vpop.f32.mrf.mxu0
    %v549 = vpop.f32.mrf.mxu0
    %v550 = vadd.f32 0.0, %v549
    %v551 = vpop.f32.mrf.mxu0
    %552 = vmatprep.mubr.bf16.mxu0 0
    %553 = vmatmul.mubr.bf16.gmra.mxu0 %v109
    %v554 = vpop.f32.mrf.mxu0
    %v555 = vadd.f32 0.0, %v554
    %v556 = vpop.f32.mrf.mxu0
    %v557 = vpop.f32.mrf.mxu0
    %v558 = vadd.f32 0.0, %v557
    %v559 = vpop.f32.mrf.mxu0
    %560 = vmatprep.mubr.bf16.mxu0 0
    %561 = vmatmul.mubr.bf16.gmra.mxu0 %v110
    %v562 = vpop.f32.mrf.mxu0
    %v563 = vadd.f32 0.0, %v562
    %v564 = vpop.f32.mrf.mxu0
    %v565 = vpop.f32.mrf.mxu0
    %v566 = vpop.f32.mrf.mxu0
    %567 = vdwg.mxu0
    %568 = vst [vmem:[#allocation2] sm:$0xff] %v306
    %569 = vst [vmem:[#allocation2 + $0x8] sm:$0xff] %v308
    %vm570 = vcmask 654336
    %571 = vst.msk [vmem:[#allocation2 + $0x10] sm:$0xff] %vm570, %v467
    %572 = vst [vmem:[#allocation2 + $0x18] sm:$0xff] %v310
    %573 = vst [vmem:[#allocation2 + $0x20] sm:$0xff] %v312
    %574 = vst.msk [vmem:[#allocation2 + $0x28] sm:$0xff] %vm570, %v470
    %575 = vst [vmem:[#allocation2 + $0x30] sm:$0xff] %v316
    %576 = vst [vmem:[#allocation2 + $0x38] sm:$0xff] %v318
    %577 = vst.msk [vmem:[#allocation2 + $0x40] sm:$0xff] %vm570, %v475
    %578 = vst [vmem:[#allocation2 + $0x48] sm:$0xff] %v320
    %579 = vst [vmem:[#allocation2 + $0x50] sm:$0xff] %v322
    %580 = vst.msk [vmem:[#allocation2 + $0x58] sm:$0xff] %vm570, %v478
    %581 = vst [vmem:[#allocation2 + $0x60] sm:$0xff] %v326
    %582 = vst [vmem:[#allocation2 + $0x68] sm:$0xff] %v328
    %583 = vst.msk [vmem:[#allocation2 + $0x70] sm:$0xff] %vm570, %v483
    %584 = vst [vmem:[#allocation2 + $0x78] sm:$0xff] %v330
    %585 = vst [vmem:[#allocation2 + $0x80] sm:$0xff] %v332
    %586 = vst.msk [vmem:[#allocation2 + $0x88] sm:$0xff] %vm570, %v486
    %587 = vst [vmem:[#allocation2 + $0x90] sm:$0xff] %v336
    %588 = vst [vmem:[#allocation2 + $0x98] sm:$0xff] %v338
    %589 = vst.msk [vmem:[#allocation2 + $0xa0] sm:$0xff] %vm570, %v491
    %590 = vst [vmem:[#allocation2 + $0xa8] sm:$0xff] %v340
    %591 = vst [vmem:[#allocation2 + $0xb0] sm:$0xff] %v342
    %592 = vst.msk [vmem:[#allocation2 + $0xb8] sm:$0xff] %vm570, %v494
    %593 = vst [vmem:[#allocation2 + $0xc0] sm:$0xff] %v346
    %594 = vst [vmem:[#allocation2 + $0xc8] sm:$0xff] %v348
    %595 = vst.msk [vmem:[#allocation2 + $0xd0] sm:$0xff] %vm570, %v499
    %596 = vst [vmem:[#allocation2 + $0xd8] sm:$0xff] %v350
    %597 = vst [vmem:[#allocation2 + $0xe0] sm:$0xff] %v352
    %598 = vst.msk [vmem:[#allocation2 + $0xe8] sm:$0xff] %vm570, %v502
    %599 = vst [vmem:[#allocation2 + $0xf0] sm:$0xff] %v356
    %600 = vst [vmem:[#allocation2 + $0xf8] sm:$0xff] %v358
    %601 = vst.msk [vmem:[#allocation2 + $0x100] sm:$0xff] %vm570, %v507
    %602 = vst [vmem:[#allocation2 + $0x108] sm:$0xff] %v360
    %603 = vst [vmem:[#allocation2 + $0x110] sm:$0xff] %v362
    %604 = vst.msk [vmem:[#allocation2 + $0x118] sm:$0xff] %vm570, %v510
    %605 = vst [vmem:[#allocation2 + $0x120] sm:$0xff] %v366
    %606 = vst [vmem:[#allocation2 + $0x128] sm:$0xff] %v368
    %607 = vst.msk [vmem:[#allocation2 + $0x130] sm:$0xff] %vm570, %v515
    %608 = vst [vmem:[#allocation2 + $0x138] sm:$0xff] %v370
    %609 = vst [vmem:[#allocation2 + $0x140] sm:$0xff] %v372
    %610 = vst.msk [vmem:[#allocation2 + $0x148] sm:$0xff] %vm570, %v518
    %611 = vst [vmem:[#allocation2 + $0x150] sm:$0xff] %v376
    %612 = vst [vmem:[#allocation2 + $0x158] sm:$0xff] %v378
    %613 = vst.msk [vmem:[#allocation2 + $0x160] sm:$0xff] %vm570, %v523
    %614 = vst [vmem:[#allocation2 + $0x168] sm:$0xff] %v380
    %615 = vst [vmem:[#allocation2 + $0x170] sm:$0xff] %v382
    %616 = vst.msk [vmem:[#allocation2 + $0x178] sm:$0xff] %vm570, %v526
    %617 = vst [vmem:[#allocation2 + $0x180] sm:$0xff] %v386
    %618 = vst [vmem:[#allocation2 + $0x188] sm:$0xff] %v388
    %619 = vst.msk [vmem:[#allocation2 + $0x190] sm:$0xff] %vm570, %v531
    %620 = vst [vmem:[#allocation2 + $0x198] sm:$0xff] %v390
    %621 = vst [vmem:[#allocation2 + $0x1a0] sm:$0xff] %v392
    %622 = vst.msk [vmem:[#allocation2 + $0x1a8] sm:$0xff] %vm570, %v534
    %623 = vst [vmem:[#allocation2 + $0x1b0] sm:$0xff] %v396
    %624 = vst [vmem:[#allocation2 + $0x1b8] sm:$0xff] %v398
    %625 = vst.msk [vmem:[#allocation2 + $0x1c0] sm:$0xff] %vm570, %v539
    %626 = vst [vmem:[#allocation2 + $0x1c8] sm:$0xff] %v400
    %627 = vst [vmem:[#allocation2 + $0x1d0] sm:$0xff] %v402
    %628 = vst.msk [vmem:[#allocation2 + $0x1d8] sm:$0xff] %vm570, %v542
    %629 = vst [vmem:[#allocation2 + $0x1e0] sm:$0xff] %v406
    %630 = vst [vmem:[#allocation2 + $0x1e8] sm:$0xff] %v408
    %631 = vst.msk [vmem:[#allocation2 + $0x1f0] sm:$0xff] %vm570, %v547
    %632 = vst [vmem:[#allocation2 + $0x1f8] sm:$0xff] %v410
    %633 = vst [vmem:[#allocation2 + $0x200] sm:$0xff] %v412
    %634 = vst.msk [vmem:[#allocation2 + $0x208] sm:$0xff] %vm570, %v550
    %635 = vst [vmem:[#allocation2 + $0x210] sm:$0xff] %v416
    %636 = vst [vmem:[#allocation2 + $0x218] sm:$0xff] %v418
    %637 = vst.msk [vmem:[#allocation2 + $0x220] sm:$0xff] %vm570, %v555
    %638 = vst [vmem:[#allocation2 + $0x228] sm:$0xff] %v420
    %639 = vst [vmem:[#allocation2 + $0x230] sm:$0xff] %v422
    %640 = vst.msk [vmem:[#allocation2 + $0x238] sm:$0xff] %vm570, %v558
    %641 = vst [vmem:[#allocation2 + $0x240] sm:$0xff] %v426
    %642 = vst [vmem:[#allocation2 + $0x248] sm:$0xff] %v428
    %643 = vst.msk [vmem:[#allocation2 + $0x250] sm:$0xff] %vm570, %v563
    // Predicated region
    $region14: #{svd_adapter_forward.1} parent=1 // pred_check
      _
    $region15: #{svd_adapter_forward.1} parent=1 // pred_check_branch
      %645 = sbr.rel (0) target = $region17
    $region16: #{svd_adapter_forward.1} parent=1 // pred_region
      %s647 = ssub.s32 9600, 9600
      %648 = vsyncadd [#allocation3], %s647
      %s649 = sshll.u32 [#allocation2], 4
      %s650 = int_to_ptr.vmem [resolvable:$true] %s649
      %655 = dma.vmem_to_hbm [thread:$0]  %s650, 9600, %s3, [#allocation3], 384, 384, 24
    $region17: #{svd_adapter_forward.1} parent=1 // pred_fallthru
      _
    // Predicated region
    $region18: #{svd_adapter_forward.1} parent=1 // pred_check
      _
    $region19: #{svd_adapter_forward.1} parent=1 // pred_check_branch
      %657 = sbr.rel (0) target = $region21
    $region20: #{svd_adapter_forward.1} parent=1 // pred_region
      %658 = dma.done [#allocation3], 9600
    $region21: #{svd_adapter_forward.1} parent=1 // pred_fallthru
      _
    %659 = vsyncpa [#allocation3], 1

</llo_original>
